<compile_context>
chip_gen: v5e
topology: v5e:2x2
jax: 0.10.0
libtpu: 0.0.40
codegen_flags: <defaults>
</compile_context>

<pallas_src>
import jax
import jax.numpy as jnp
from jax import lax
from jax.experimental import pallas as pl
from jax.experimental.pallas import tpu as pltpu


def _fc_bn_relu_kernel(x_ref, w_ref, gamma_ref, beta_ref, o_ref, acc_ref):
    """x_ref: (B, TK); w_ref: (TN, TK); gamma/beta: (1, TN); o_ref: (B, TN); acc: (B, TN) f32."""
    k = pl.program_id(1)

    @pl.when(k == 0)
    def _():
        acc_ref[...] = jnp.zeros_like(acc_ref)

    # Linear (no bias; it cancels under train-mode BN):  acc += x @ W^T  (contract last dims)
    acc_ref[...] += lax.dot_general(
        x_ref[...], w_ref[...],
        dimension_numbers=(((1,), (1,)), ((), ())),
        preferred_element_type=jnp.float32,
    )

    @pl.when(k == pl.num_programs(1) - 1)
    def _():
        y = acc_ref[...]                                   # (B, TN) f32
        inv_b = 1.0 / y.shape[0]
        mean = jnp.sum(y, axis=0, keepdims=True) * inv_b   # (1, TN)
        centered = y - mean
        var = jnp.sum(centered * centered, axis=0, keepdims=True) * inv_b
        inv_std = lax.rsqrt(var + 1e-5)                    # EUP slot
        # Fused BN affine: one mul + one add per element on the (B, TN) tile.
        scale = gamma_ref[...].astype(jnp.float32) * inv_std
        shift = beta_ref[...].astype(jnp.float32) - mean * scale
        # Dropout(p=0.0) == identity; ReLU.
        o_ref[...] = jnp.maximum(y * scale + shift, 0.0).astype(o_ref.dtype)


def simple_fully_connected_block(x, weight, bias=None, gamma=None, beta=None,
                                 *, tn=128, tk=128):
    """Forward of SimpleFullyConnectedBlock (batch_norm=True, dropout=0.0, ReLU).

    x: (B, in_features); weight: (out_features, in_features) as in nn.Linear.
    `bias` is accepted for API parity but mathematically cancels under train-mode BN.
    Returns (B, out_features).
    """
    del bias  # cancels exactly under batch normalization (train mode)
    B, in_f = x.shape
    out_f, in_f_w = weight.shape
    assert in_f_w == in_f, "weight must be (out_features, in_features)"
    assert B % 8 == 0, "batch must be a multiple of 8 (TPU sublane); BN needs the full batch resident"

    if gamma is None:
        gamma = jnp.ones((out_f,), dtype=x.dtype)
    if beta is None:
        beta = jnp.zeros((out_f,), dtype=x.dtype)

    # Pad feature dims to lane-dense multiples of the tile sizes (zero padding is exact).
    in_p = pl.cdiv(in_f, tk) * tk
    out_p = pl.cdiv(out_f, tn) * tn
    x_p = jnp.pad(x, ((0, 0), (0, in_p - in_f)))
    w_p = jnp.pad(weight, ((0, out_p - out_f), (0, in_p - in_f)))
    g_p = jnp.pad(gamma.reshape(1, out_f), ((0, 0), (0, out_p - out_f)), constant_values=1)
    b_p = jnp.pad(beta.reshape(1, out_f), ((0, 0), (0, out_p - out_f)))

    grid = (out_p // tn, in_p // tk)   # (N parallel, K reduction)

    # VMEM budget: double-buffered x/w/gamma/beta/out tiles + resident f32 accumulator.
    isz = jnp.dtype(x.dtype).itemsize
    osz = jnp.dtype(x.dtype).itemsize
    need = (2 * (B * tk + tn * tk) * isz      # x + w tiles (double-buffered)
            + 2 * 2 * tn * isz                # gamma + beta tiles
            + 2 * B * tn * osz                # output tile (double-buffered)
            + B * tn * 4)                     # f32 accumulator scratch
    vmem_limit = int(min(max(2 * need, 32 * 2 ** 20), 60 * 2 ** 20))  # fits v7x's 64 MiB

    out_padded = pl.pallas_call(
        _fc_bn_relu_kernel,
        out_shape=jax.ShapeDtypeStruct((B, out_p), x.dtype),
        grid_spec=pltpu.PrefetchScalarGridSpec(
            num_scalar_prefetch=0,
            grid=grid,
            in_specs=[
                pl.BlockSpec((B, tk), lambda n, k: (0, k)),    # x: full batch, K-tile
                pl.BlockSpec((tn, tk), lambda n, k: (n, k)),   # weight (out, in) tile
                pl.BlockSpec((1, tn), lambda n, k: (0, n)),    # gamma
                pl.BlockSpec((1, tn), lambda n, k: (0, n)),    # beta
            ],
            out_specs=pl.BlockSpec((B, tn), lambda n, k: (0, n)),  # lane-dense (>=128) output
            scratch_shapes=[pltpu.VMEM((B, tn), jnp.float32)],
        ),
        compiler_params=pltpu.CompilerParams(
            dimension_semantics=("parallel", "arbitrary"),
            vmem_limit_bytes=vmem_limit,
        ),
    )(x_p, w_p, g_p, b_p)

    return out_padded[:, :out_f]


def reference(x, weight, bias, gamma, beta, eps=1e-5):
    y = x @ weight.T + bias
    mean = jnp.mean(y, axis=0, keepdims=True)
    var = jnp.mean((y - mean) ** 2, axis=0, keepdims=True)
    y = (y - mean) / jnp.sqrt(var + eps) * gamma + beta
    return jnp.maximum(y, 0.0)


if __name__ == "__main__":
    key = jax.random.PRNGKey(0)

    def make_case(key, batch, in_features, out_features):
        k1, k2, k3 = jax.random.split(key, 3)
        x = jax.random.normal(k1, (batch, in_features), dtype=jnp.float32)
        bound = 1.0 / (in_features ** 0.5)
        weight = jax.random.uniform(k2, (out_features, in_features),
                                    minval=-bound, maxval=bound, dtype=jnp.float32)
        bias = jax.random.uniform(k3, (out_features,),
                                  minval=-bound, maxval=bound, dtype=jnp.float32)
        gamma = jnp.ones((out_features,), dtype=jnp.float32)
        beta = jnp.zeros((out_features,), dtype=jnp.float32)
        return x, weight, bias, gamma, beta

    # Case 1: the module's toy size (single padded tile).
    ka, kb = jax.random.split(key)
    x, w, b, g, be = make_case(ka, batch=8, in_features=32, out_features=32)
    out = jax.block_until_ready(simple_fully_connected_block(x, w, b, g, be))
    ref = reference(x, w, b, g, be)
    assert out.shape == ref.shape
    assert jnp.allclose(out, ref, atol=1e-4, rtol=1e-5), "mismatch vs reference (case 1)"

    # Case 2: multi-tile grid (exercises N-parallel / K-reduction pipelining).
    x, w, b, g, be = make_case(kb, batch=64, in_features=384, out_features=256)
    out = jax.block_until_ready(simple_fully_connected_block(x, w, b, g, be))
    ref = reference(x, w, b, g, be)
    assert out.shape == ref.shape
    assert jnp.allclose(out, ref, atol=1e-4, rtol=1e-5), "mismatch vs reference (case 2)"

    print("KERNEL_OK")
</pallas_src>

<mosaic_0001>
module attributes {stable_mosaic.version = 11 : i64} {
  func.func @_fc_bn_relu_kernel(%arg0: i32, %arg1: i32, %arg2: memref<8x128xf32, #tpu.memory_space<vmem>>, %arg3: memref<128x128xf32, #tpu.memory_space<vmem>>, %arg4: memref<1x128xf32, #tpu.memory_space<vmem>>, %arg5: memref<1x128xf32, #tpu.memory_space<vmem>>, %arg6: memref<8x128xf32, #tpu.memory_space<vmem>>, %arg7: memref<8x128xf32, #tpu.memory_space<vmem>>) attributes {dimension_semantics = [#tpu.dimension_semantics<parallel>, #tpu.dimension_semantics<arbitrary>], iteration_bounds = array<i64: 1, 1>, scalar_prefetch = 0 : i64, scratch_operands = 1 : i64, tpu.core_type = #tpu.core_type<tc>, window_params = [{transform_indices = @transform_0, window_bounds = array<i64: 8, 128>}, {transform_indices = @transform_1, window_bounds = array<i64: 128, 128>}, {transform_indices = @transform_2, window_bounds = array<i64: 1, 128>}, {transform_indices = @transform_3, window_bounds = array<i64: 1, 128>}, {transform_indices = @transform_4, window_bounds = array<i64: 8, 128>}]} {
    %c0_i32 = arith.constant 0 : i32
    %0 = arith.cmpi eq, %arg1, %c0_i32 : i32
    %1 = arith.extui %0 : i1 to i32
    %c0_i32_0 = arith.constant 0 : i32
    %2 = arith.cmpi ne, %1, %c0_i32_0 : i32
    scf.if %2 {
      %cst_10 = arith.constant 0.000000e+00 : f32
      %12 = vector.broadcast %cst_10 : f32 to vector<8x128xf32>
      %c0_11 = arith.constant 0 : index
      %c0_12 = arith.constant 0 : index
      %13 = vector.load %arg7[%c0_11, %c0_12] : memref<8x128xf32, #tpu.memory_space<vmem>>, vector<8x128xf32>
      tpu.vector_store %arg7[%c0_11, %c0_12], %12 {strides = array<i32>} : memref<8x128xf32, #tpu.memory_space<vmem>>, vector<8x128xf32>,
    } else {
    }
    %c0 = arith.constant 0 : index
    %c0_1 = arith.constant 0 : index
    %3 = vector.load %arg7[%c0, %c0_1] : memref<8x128xf32, #tpu.memory_space<vmem>>, vector<8x128xf32>
    %c0_2 = arith.constant 0 : index
    %c0_3 = arith.constant 0 : index
    %4 = vector.load %arg2[%c0_2, %c0_3] : memref<8x128xf32, #tpu.memory_space<vmem>>, vector<8x128xf32>
    %c0_4 = arith.constant 0 : index
    %c0_5 = arith.constant 0 : index
    %5 = vector.load %arg3[%c0_4, %c0_5] : memref<128x128xf32, #tpu.memory_space<vmem>>, vector<128x128xf32>
    %cst = arith.constant dense<0.000000e+00> : vector<8x128xf32>
    %6 = tpu.matmul %4, %5, %cst {dimension_numbers = #tpu.dot_dimension_numbers<[1], [1], [0], [0], [0, 0, 1, 0], [], []>} : vector<8x128xf32>, vector<128x128xf32>, vector<8x128xf32> -> vector<8x128xf32>
    %7 = arith.addf %3, %6 : vector<8x128xf32>
    %c0_6 = arith.constant 0 : index
    %c0_7 = arith.constant 0 : index
    %8 = vector.load %arg7[%c0_6, %c0_7] : memref<8x128xf32, #tpu.memory_space<vmem>>, vector<8x128xf32>
    tpu.vector_store %arg7[%c0_6, %c0_7], %7 {strides = array<i32>} : memref<8x128xf32, #tpu.memory_space<vmem>>, vector<8x128xf32>,
    %c0_i32_8 = arith.constant 0 : i32
    %9 = arith.cmpi eq, %arg1, %c0_i32_8 : i32
    %10 = arith.extui %9 : i1 to i32
    %c0_i32_9 = arith.constant 0 : i32
    %11 = arith.cmpi ne, %10, %c0_i32_9 : i32
    scf.if %11 {
      %c0_10 = arith.constant 0 : index
      %c0_11 = arith.constant 0 : index
      %12 = vector.load %arg7[%c0_10, %c0_11] : memref<8x128xf32, #tpu.memory_space<vmem>>, vector<8x128xf32>
      %cst_12 = arith.constant dense<0.000000e+00> : vector<128xf32>
      %13 = vector.multi_reduction <add>, %12, %cst_12 [0] : vector<8x128xf32> to vector<128xf32>
      %14 = vector.shape_cast %13 : vector<128xf32> to vector<1x128xf32>
      %cst_13 = arith.constant 1.250000e-01 : f32
      %15 = vector.broadcast %cst_13 : f32 to vector<1x128xf32>
      %16 = arith.mulf %14, %15 : vector<1x128xf32>
      %17 = vector.broadcast %16 : vector<1x128xf32> to vector<8x128xf32>
      %18 = arith.subf %12, %17 : vector<8x128xf32>
      %19 = arith.mulf %18, %18 : vector<8x128xf32>
      %cst_14 = arith.constant dense<0.000000e+00> : vector<128xf32>
      %20 = vector.multi_reduction <add>, %19, %cst_14 [0] : vector<8x128xf32> to vector<128xf32>
      %21 = vector.shape_cast %20 : vector<128xf32> to vector<1x128xf32>
      %cst_15 = arith.constant 1.250000e-01 : f32
      %22 = vector.broadcast %cst_15 : f32 to vector<1x128xf32>
      %23 = arith.mulf %21, %22 : vector<1x128xf32>
      %cst_16 = arith.constant 9.99999974E-6 : f32
      %24 = vector.broadcast %cst_16 : f32 to vector<1x128xf32>
      %25 = arith.addf %23, %24 : vector<1x128xf32>
      %26 = math.rsqrt %25 : vector<1x128xf32>
      %c0_17 = arith.constant 0 : index
      %c0_18 = arith.constant 0 : index
      %27 = vector.load %arg4[%c0_17, %c0_18] : memref<1x128xf32, #tpu.memory_space<vmem>>, vector<1x128xf32>
      %28 = arith.mulf %27, %26 : vector<1x128xf32>
      %c0_19 = arith.constant 0 : index
      %c0_20 = arith.constant 0 : index
      %29 = vector.load %arg5[%c0_19, %c0_20] : memref<1x128xf32, #tpu.memory_space<vmem>>, vector<1x128xf32>
      %30 = arith.mulf %16, %28 : vector<1x128xf32>
      %31 = arith.subf %29, %30 : vector<1x128xf32>
      %32 = vector.broadcast %28 : vector<1x128xf32> to vector<8x128xf32>
      %33 = arith.mulf %12, %32 : vector<8x128xf32>
      %34 = vector.broadcast %31 : vector<1x128xf32> to vector<8x128xf32>
      %35 = arith.addf %33, %34 : vector<8x128xf32>
      %cst_21 = arith.constant 0.000000e+00 : f32
      %36 = vector.broadcast %cst_21 : f32 to vector<8x128xf32>
      %37 = arith.maximumf %35, %36 : vector<8x128xf32>
      %c0_22 = arith.constant 0 : index
      %c0_23 = arith.constant 0 : index
      %38 = vector.load %arg6[%c0_22, %c0_23] : memref<8x128xf32, #tpu.memory_space<vmem>>, vector<8x128xf32>
      tpu.vector_store %arg6[%c0_22, %c0_23], %37 {strides = array<i32>} : memref<8x128xf32, #tpu.memory_space<vmem>>, vector<8x128xf32>,
    } else {
    }
    return
  }
  func.func @transform_0(%arg0: i32, %arg1: i32) -> (i32, i32) {
    %c0_i32 = arith.constant 0 : i32
    %c0_i32_0 = arith.constant 0 : i32
    return %c0_i32, %arg1 : i32, i32
  }
  func.func @transform_1(%arg0: i32, %arg1: i32) -> (i32, i32) {
    %c0_i32 = arith.constant 0 : i32
    return %arg0, %arg1 : i32, i32
  }
  func.func @transform_2(%arg0: i32, %arg1: i32) -> (i32, i32) {
    %c0_i32 = arith.constant 0 : i32
    %c0_i32_0 = arith.constant 0 : i32
    return %c0_i32, %arg0 : i32, i32
  }
  func.func @transform_3(%arg0: i32, %arg1: i32) -> (i32, i32) {
    %c0_i32 = arith.constant 0 : i32
    %c0_i32_0 = arith.constant 0 : i32
    return %c0_i32, %arg0 : i32, i32
  }
  func.func @transform_4(%arg0: i32, %arg1: i32) -> (i32, i32) {
    %c0_i32 = arith.constant 0 : i32
    %c0_i32_0 = arith.constant 0 : i32
    return %c0_i32, %arg0 : i32, i32
  }
}

</mosaic_0001>

<llo_original>
// kernel: tpu_custom_call.1
$region0: #{tpu_custom_call.1}
  #allocation0 [shape = 'u32[]', space=smem, size = 0x4, offset = 0x4, fixed_abs, tag = 'smem constant byte address 0x4 - core index']
  #allocation1 [shape = 'u32[72,128]{1,0:T(1,128)}', space=vmem, size = 0x9000, scoped, tag = 'internal scratch']
  #allocation2 [shape = 'f32[8,128]{1,0:T(8,128)}', space=vmem, size = 0x1000, scoped, tag = 'scratch operand']
  %s0 = inlined_call_operand.hbm [shape: f32[8,128], index: 0, kind: input, shape index: {}]
  %s1 = inlined_call_operand.hbm [shape: f32[128,128], index: 1, kind: input, shape index: {}]
  %s2 = inlined_call_operand.vmem [shape: f32[1,128], index: 2, kind: input, shape index: {}]
  %s3 = inlined_call_operand.vmem [shape: f32[1,128], index: 3, kind: input, shape index: {}]
  %s4 = inlined_call_operand.hbm [shape: f32[8,128], index: 4, kind: output, shape index: {}]
  %s5 = sld [smem:[#allocation0]]
  $region42: #{tpu_custom_call.1} parent=0
    _
  %s7 = ssub.s32 1, %s5
  %s8 = scalar_select 0, %s7, %s5
  $region1: #{tpu_custom_call.1} parent=0
    #allocation3 [shape = 'u8[4096]{0}', space=vmem, size = 0x1000, scoped, tag = 'input window, operand 0, single buffered']
    #allocation4 [shape = 's32[1]{0}', space=sflag, size = 0x4, scoped, tag = 'scoped memory for tpu_custom_call.1']
    #allocation5 [shape = 's32[1]{0}', space=sflag, size = 0x4, scoped, tag = 'scoped memory for tpu_custom_call.1']
    #allocation6 [shape = 'u8[65536]{0}', space=vmem, size = 0x10000, scoped, tag = 'input window, operand 1, single buffered']
    #allocation7 [shape = 's32[1]{0}', space=sflag, size = 0x4, scoped, tag = 'scoped memory for tpu_custom_call.1']
    #allocation8 [shape = 'u8[4096]{0}', space=vmem, size = 0x1000, scoped, tag = 'output window, operand 0, single buffered']
    %9 = vsyncpa [#allocation4], 0
    %10 = vsyncpa [#allocation7], 0
    %11 = vsyncpa [#allocation5], 0
    // Predicated region
    $region2: #{tpu_custom_call.1} parent=1 // pred_check
      _
    $region3: #{tpu_custom_call.1} parent=1 // pred_check_branch
      %13 = sbr.rel (0) target = $region5
    $region4: #{tpu_custom_call.1} parent=1 // pred_region
      %15 = vsyncadd [#allocation4], 0
      %s17 = sshll.u32 %s0, 4
      %s18 = int_to_ptr.hbm [resolvable:$true] %s17
      %s19 = sshll.u32 [#allocation3], 4
      %s20 = int_to_ptr.vmem [resolvable:$true] %s19
      %22 = dma.hbm_to_vmem [thread:$0]  %s18, 128, %s20, [#allocation4]
    $region5: #{tpu_custom_call.1} parent=1 // pred_fallthru
      _
    // Predicated region
    $region6: #{tpu_custom_call.1} parent=1 // pred_check
      _
    $region7: #{tpu_custom_call.1} parent=1 // pred_check_branch
      %24 = sbr.rel (0) target = $region9
    $region8: #{tpu_custom_call.1} parent=1 // pred_region
      %26 = vsyncadd [#allocation7], 0
      %s27 = sshll.u32 %s1, 4
      %s28 = int_to_ptr.hbm [resolvable:$true] %s27
      %s29 = sshll.u32 [#allocation6], 4
      %s30 = int_to_ptr.vmem [resolvable:$true] %s29
      %35 = dma.hbm_to_vmem [thread:$0]  %s28, 2048, %s30, [#allocation7], 128, 128, 8
    $region9: #{tpu_custom_call.1} parent=1 // pred_fallthru
      _
    // Predicated region
    $region10: #{tpu_custom_call.1} parent=1 // pred_check
      _
    $region11: #{tpu_custom_call.1} parent=1 // pred_check_branch
      %37 = sbr.rel (0) target = $region13
    $region12: #{tpu_custom_call.1} parent=1 // pred_region
      _
    $region13: #{tpu_custom_call.1} parent=1 // pred_fallthru
      _
    // Predicated region
    $region14: #{tpu_custom_call.1} parent=1 // pred_check
      _
    $region15: #{tpu_custom_call.1} parent=1 // pred_check_branch
      %39 = sbr.rel (0) target = $region17
    $region16: #{tpu_custom_call.1} parent=1 // pred_region
      _
    $region17: #{tpu_custom_call.1} parent=1 // pred_fallthru
      _
    // Predicated region
    $region18: #{tpu_custom_call.1} parent=1 // pred_check
      _
    $region19: #{tpu_custom_call.1} parent=1 // pred_check_branch
      %41 = sbr.rel (0) target = $region21
    $region20: #{tpu_custom_call.1} parent=1 // pred_region
      %43 = dma.done [#allocation4], 128
    $region21: #{tpu_custom_call.1} parent=1 // pred_fallthru
      _
    // Predicated region
    $region22: #{tpu_custom_call.1} parent=1 // pred_check
      _
    $region23: #{tpu_custom_call.1} parent=1 // pred_check_branch
      %45 = sbr.rel (0) target = $region25
    $region24: #{tpu_custom_call.1} parent=1 // pred_region
      %47 = dma.done [#allocation7], 2048
    $region25: #{tpu_custom_call.1} parent=1 // pred_fallthru
      _
    %p48 = scmp.eq.s32.totalorder 0, 0
    // Predicated region
    $region26: #{tpu_custom_call.1} parent=1 // pred_check
      %p49 = pneg %p48
    $region27: #{tpu_custom_call.1} parent=1 // pred_check_branch
      %51 = sbr.rel (%p49) target = $region29
    $region28: #{tpu_custom_call.1} parent=1 // pred_region
      %52 = vst [vmem:[#allocation2] sm:$0xff] 0.0
    $region29: #{tpu_custom_call.1} parent=1 // pred_fallthru
      _
    %v53 = vld [vmem:[#allocation2] sm:$0xff]
    %v54 = vld [vmem:[#allocation3] sm:$0xff]
    %v55 = vld [vmem:[#allocation6] sm:$0xff]
    %v56 = vld [vmem:[#allocation6 + $0x8] sm:$0xff]
    %v57 = vld [vmem:[#allocation6 + $0x10] sm:$0xff]
    %v58 = vld [vmem:[#allocation6 + $0x18] sm:$0xff]
    %v59 = vld [vmem:[#allocation6 + $0x20] sm:$0xff]
    %v60 = vld [vmem:[#allocation6 + $0x28] sm:$0xff]
    %v61 = vld [vmem:[#allocation6 + $0x30] sm:$0xff]
    %v62 = vld [vmem:[#allocation6 + $0x38] sm:$0xff]
    %v63 = vld [vmem:[#allocation6 + $0x40] sm:$0xff]
    %v64 = vld [vmem:[#allocation6 + $0x48] sm:$0xff]
    %v65 = vld [vmem:[#allocation6 + $0x50] sm:$0xff]
    %v66 = vld [vmem:[#allocation6 + $0x58] sm:$0xff]
    %v67 = vld [vmem:[#allocation6 + $0x60] sm:$0xff]
    %v68 = vld [vmem:[#allocation6 + $0x68] sm:$0xff]
    %v69 = vld [vmem:[#allocation6 + $0x70] sm:$0xff]
    %v70 = vld [vmem:[#allocation6 + $0x78] sm:$0xff]
    %71 = vmatpush.xpose.msra.mxu0 %v70
    %72 = vmatpush.xpose.msra.mxu0 %v69
    %73 = vmatpush.xpose.msra.mxu0 %v68
    %74 = vmatpush.xpose.msra.mxu0 %v67
    %75 = vmatpush.xpose.msra.mxu0 %v66
    %76 = vmatpush.xpose.msra.mxu0 %v65
    %77 = vmatpush.xpose.msra.mxu0 %v64
    %78 = vmatpush.xpose.msra.mxu0 %v63
    %79 = vmatpush.xpose.msra.mxu0 %v62
    %80 = vmatpush.xpose.msra.mxu0 %v61
    %81 = vmatpush.xpose.msra.mxu0 %v60
    %82 = vmatpush.xpose.msra.mxu0 %v59
    %83 = vmatpush.xpose.msra.mxu0 %v58
    %84 = vmatpush.xpose.msra.mxu0 %v57
    %85 = vmatpush.xpose.msra.mxu0 %v56
    %86 = vmatpush.xpose.msra.mxu0 %v55
    %87 = vmatmul.f32.gmra.mxu0 %v54
    %v88 = vpop.f32.mrf.mxu0
    %v89 = vadd.f32 0.0, %v88
    %90 = vdwg.mxu0
    %v91 = vadd.f32 %v53, %v89
    %92 = vst [vmem:[#allocation2] sm:$0xff] %v91
    // Predicated region
    $region30: #{tpu_custom_call.1} parent=1 // pred_check
      %p93 = pneg %p48
    $region31: #{tpu_custom_call.1} parent=1 // pred_check_branch
      %95 = sbr.rel (%p93) target = $region33
    $region32: #{tpu_custom_call.1} parent=1 // pred_region
      %v96 = vld [vmem:[#allocation2] sm:$0xff]
      %v97 = vrot.slane %v96, 4
      %v98 = vadd.f32 %v96, %v97
      %v99 = vrot.slane %v98, 2
      %v100 = vadd.f32 %v98, %v99
      %v101 = vrot.slane %v100, 1
      %v102 = vadd.f32 %v100, %v101
      %v103 = vmul.f32 %v102, 0.125
      %v104 = vsub.f32 %v96, %v103
      %v105 = vmul.f32 %v104, %v104
      %v106 = vrot.slane %v105, 4
      %v107 = vadd.f32 %v105, %v106
      %v108 = vrot.slane %v107, 2
      %v109 = vadd.f32 %v107, %v108
      %v110 = vrot.slane %v109, 1
      %v111 = vadd.f32 %v109, %v110
      %v112 = vmul.f32 %v111, 0.125
      %v113 = vadd.f32 %v112, 1e-05
      %v114 = vrsqrt.pop %v113
      %v115 = vmul.f32 %v114, %v113
      %v116 = vmul.f32 %v115, %v114
      %v117 = vmul.f32 0.5, %v116
      %v118 = vsub.f32 1.5, %v117
      %v119 = vmul.f32 %v114, %v118
      %vm120 = vweird.f32 %v113
      %vm121 = vweird.f32 %v114
      %vm122 = vmor %vm120, %vm121
      %v123 = vsel %vm122, %v114, %v119
      %v124 = vld [vmem:[%s2] sm:$0x1]
      %v125 = vmul.f32 %v124, %v123
      %v126 = vld [vmem:[%s3] sm:$0x1]
      %v127 = vmul.f32 %v103, %v125
      %v128 = vsub.f32 %v126, %v127
      %v130 = vperm.slane %v125, 0
      %v132 = vmul.f32 %v96, %v130
      %v134 = vperm.slane %v128, 0
      %v136 = vadd.f32 %v132, %v134
      %v137 = vmax.f32 %v136, 0.0
      %138 = vst [vmem:[#allocation8] sm:$0xff] %v137
    $region33: #{tpu_custom_call.1} parent=1 // pred_fallthru
      _
    // Predicated region
    $region34: #{tpu_custom_call.1} parent=1 // pred_check
      _
    $region35: #{tpu_custom_call.1} parent=1 // pred_check_branch
      %140 = sbr.rel (0) target = $region37
    $region36: #{tpu_custom_call.1} parent=1 // pred_region
      %142 = vsyncadd [#allocation5], 0
      %s144 = sshll.u32 [#allocation8], 4
      %s145 = int_to_ptr.vmem [resolvable:$true] %s144
      %s146 = sshll.u32 %s4, 4
      %s147 = int_to_ptr.hbm [resolvable:$true] %s146
      %149 = dma.vmem_to_hbm [thread:$0]  %s145, 128, %s147, [#allocation5]
    $region37: #{tpu_custom_call.1} parent=1 // pred_fallthru
      _
    // Predicated region
    $region38: #{tpu_custom_call.1} parent=1 // pred_check
      _
    $region39: #{tpu_custom_call.1} parent=1 // pred_check_branch
      %151 = sbr.rel (0) target = $region41
    $region40: #{tpu_custom_call.1} parent=1 // pred_region
      %153 = dma.done [#allocation5], 128
    $region41: #{tpu_custom_call.1} parent=1 // pred_fallthru
      _
    %154 = vsyncpa [#allocation4], 1
    %155 = vsyncpa [#allocation7], 1
    %156 = vsyncpa [#allocation5], 1

</llo_original>
